<compile_context>
chip_gen: v5e
topology: v5e:2x2
jax: 0.10.0
libtpu: 0.0.40
codegen_flags: <defaults>
</compile_context>

<pallas_src>
import functools

import jax
import jax.numpy as jnp
import numpy as np
from jax.experimental import pallas as pl
from jax.experimental.pallas import tpu as pltpu


# ---------------------------------------------------------------------------
# Kernel
# ---------------------------------------------------------------------------
def _divide_predictor_kernel(x_ref, mask_ref, w_ref, b_ref,
                             logits_ref, preds_ref, *, head_nums, att_dim):
    """One grid step == one batch block of Bt samples.

    Fuses (QK projection + folded V/output/classifier projection) into a single
    MXU matmul, runs masked multi-head attention batched over the Bt samples,
    and emits masked logits [Bt, N] plus the per-sample argmax [Bt, 1].
    """
    Bt, N, C = x_ref.shape
    H = head_nums
    A = att_dim
    Dh = A // H
    inv_sqrt_d = 1.0 / float(Dh) ** 0.5

    # --- single fused projection over the flattened batch*segment rows ------
    # columns of w_ref: [ Wq (A) | Wk (A) | Wv_h.Wo.wc per head (H) | wc (1) ]
    x2 = x_ref[...].reshape(Bt * N, C)
    proj = jnp.dot(x2, w_ref[...], preferred_element_type=jnp.float32) + b_ref[...]
    proj = proj.reshape(Bt, N, 2 * A + H + 1)

    mask3 = mask_ref[...]                         # [Bt, 1, N]  1 = valid segment
    key_bias = (1.0 - mask3) * (-1e9)             # mask padded keys

    # running logits in column layout [Bt, N, 1]; base = x@wc + bo@wc + bc
    acc = proj[:, :, 2 * A + H:]

    for h in range(H):                            # H is small & static
        qh = proj[:, :, h * Dh:(h + 1) * Dh]              # [Bt, N, Dh]
        kh = proj[:, :, A + h * Dh:A + (h + 1) * Dh]      # [Bt, N, Dh]
        vh = proj[:, :, 2 * A + h:2 * A + h + 1]          # [Bt, N, 1] folded V

        s = jnp.einsum("bnd,bmd->bnm", qh, kh,
                       preferred_element_type=jnp.float32) * inv_sqrt_d
        s = s + key_bias                                   # broadcast over queries
        s = s - jnp.max(s, axis=-1, keepdims=True)         # stable softmax
        p = jnp.exp(s)
        p = p / jnp.sum(p, axis=-1, keepdims=True)

        acc = acc + jnp.einsum("bnm,bmo->bno", p, vh,
                               preferred_element_type=jnp.float32)

    # tiny [Bt, N, 1] -> [Bt, N] relayout (only the final logits, never a
    # full [N, C] tile), then mask + vectorized first-argmax for the block.
    logits_row = jnp.transpose(acc, (0, 2, 1))[:, 0, :]    # [Bt, N]
    mask2 = mask3[:, 0, :]                                  # [Bt, N]
    masked = logits_row + (mask2 - 1.0) * 1e8
    logits_ref[...] = masked

    ids = jax.lax.broadcasted_iota(jnp.int32, (Bt, N), 1)
    maxv = jnp.max(masked, axis=1, keepdims=True)
    idx = jnp.min(jnp.where(masked >= maxv, ids, N), axis=1, keepdims=True)
    preds_ref[...] = idx.astype(jnp.int32)                 # [Bt, 1]


# ---------------------------------------------------------------------------
# Wrapper-side helpers
# ---------------------------------------------------------------------------
def _pick_batch_block(B, N, C, A, H, vmem_budget_bytes=16 * 1024 * 1024):
    """Derive the batch block Bt from a VMEM budget (conservative for v7x's
    64 MiB VMEM / ~32 MiB scoped default; works on v5e/v6e too)."""
    per_batch = 4 * (2 * N * C                  # x block (double-buffered)
                     + 2 * N                    # mask block
                     + N * (2 * A + H + 1)      # fused projection
                     + 3 * N * N                # score / prob temporaries
                     + 2 * N + 2)               # logits + preds (double-buffered)
    bt = max(1, vmem_budget_bytes // max(per_batch, 1))
    bt = min(bt, 256)                           # keep vreg pressure sane
    if B <= bt:
        return B, B                             # single grid step, Bt == B
    bt = max(8, (bt // 8) * 8)                  # (Bt, N) block needs Bt % 8 == 0
    b_pad = ((B + bt - 1) // bt) * bt
    return bt, b_pad


def _pack_params(params, head_nums):
    """Fold Wv/Wo/classifier algebraically and concatenate everything into a
    single [C, 2A+H+1] weight + [1, 2A+H+1] bias (4 kernel inputs total)."""
    HI = jax.lax.Precision.HIGHEST
    wq, wk, wv = params["wq"], params["wk"], params["wv"]   # [C, A]
    bq, bk, bv = params["bq"], params["bk"], params["bv"]   # [1, A]
    wo, bo = params["wo"], params["bo"]                     # [A, C], [1, C]
    wc, bc = params["wc"], params["bc"]                     # [1, C], [1, 1]
    C, A = wq.shape
    H = head_nums
    Dh = A // H

    wc_col = wc.T                                           # [C, 1]
    u = jnp.matmul(wo, wc_col, precision=HI)                # [A, 1] = Wo @ wc
    u_h = u.reshape(H, Dh)
    wv_fold = jnp.einsum("chd,hd->ch", wv.reshape(C, H, Dh), u_h,
                         precision=HI)                      # [C, H]
    bv_fold = jnp.einsum("hd,hd->h", bv.reshape(H, Dh), u_h,
                         precision=HI)[None, :]             # [1, H]
    base_b = jnp.matmul(bo, wc_col, precision=HI) + bc      # [1, 1]

    w_all = jnp.concatenate([wq, wk, wv_fold, wc_col], axis=1).astype(jnp.float32)
    b_all = jnp.concatenate([bq, bk, bv_fold, base_b], axis=1).astype(jnp.float32)
    return w_all, b_all


def _pallas_forward(x_bnc, masks, w_all, b_all, head_nums, att_dim):
    """x_bnc: [B, N, C] f32, masks: [B, N] f32 -> (logits [B, N], preds [B])."""
    B, N, C = x_bnc.shape
    P = w_all.shape[1]
    H = head_nums
    Bt, B_pad = _pick_batch_block(B, N, C, att_dim, H)
    if B_pad != B:
        x_bnc = jnp.pad(x_bnc, ((0, B_pad - B), (0, 0), (0, 0)))
        masks = jnp.pad(masks, ((0, B_pad - B), (0, 0)))

    kernel = functools.partial(_divide_predictor_kernel,
                               head_nums=head_nums, att_dim=att_dim)
    grid_spec = pltpu.PrefetchScalarGridSpec(
        num_scalar_prefetch=0,
        grid=(B_pad // Bt,),
        in_specs=[
            pl.BlockSpec((Bt, N, C), lambda i: (i, 0, 0)),   # x block
            pl.BlockSpec((Bt, 1, N), lambda i: (i, 0, 0)),   # mask block
            pl.BlockSpec((C, P), lambda i: (0, 0)),          # fused weights (resident)
            pl.BlockSpec((1, P), lambda i: (0, 0)),          # fused biases (resident)
        ],
        out_specs=(
            pl.BlockSpec((Bt, N), lambda i: (i, 0)),         # masked logits slab
            pl.BlockSpec((Bt, 1), lambda i: (i, 0)),         # argmax per sample
        ),
    )

    logits, preds = pl.pallas_call(
        kernel,
        out_shape=(jax.ShapeDtypeStruct((B_pad, N), jnp.float32),
                   jax.ShapeDtypeStruct((B_pad, 1), jnp.int32)),
        grid_spec=grid_spec,
        compiler_params=pltpu.CompilerParams(
            dimension_semantics=("parallel",)),              # megacore on v7x
    )(x_bnc, masks[:, None, :], w_all, b_all)
    return logits[:B], preds[:B, 0]


def _reference_forward(x_bnc, masks, params, head_nums):
    """Pure-JAX reference of the assumed SALayer + classifier (for the check)."""
    HI = jax.lax.Precision.HIGHEST
    B, N, C = x_bnc.shape
    A = params["wq"].shape[1]
    Dh = A // head_nums
    q = jnp.matmul(x_bnc, params["wq"], precision=HI) + params["bq"]
    k = jnp.matmul(x_bnc, params["wk"], precision=HI) + params["bk"]
    v = jnp.matmul(x_bnc, params["wv"], precision=HI) + params["bv"]
    qh = q.reshape(B, N, head_nums, Dh).transpose(0, 2, 1, 3)
    kh = k.reshape(B, N, head_nums, Dh).transpose(0, 2, 1, 3)
    vh = v.reshape(B, N, head_nums, Dh).transpose(0, 2, 1, 3)
    s = jnp.einsum("bhqd,bhkd->bhqk", qh, kh, precision=HI) / (Dh ** 0.5)
    s = s + ((1.0 - masks) * (-1e9))[:, None, None, :]
    p = jax.nn.softmax(s, axis=-1)
    o = jnp.einsum("bhqk,bhkd->bhqd", p, vh, precision=HI)
    o = o.transpose(0, 2, 1, 3).reshape(B, N, A)
    y = x_bnc + jnp.matmul(o, params["wo"], precision=HI) + params["bo"]
    logits = jnp.matmul(y, params["wc"].T, precision=HI)[..., 0] + params["bc"][0, 0]
    masked = logits - (1.0 - masks) * 1e8
    return masked, jnp.argmax(masked, axis=1)


# ---------------------------------------------------------------------------
# Module wrapper
# ---------------------------------------------------------------------------
class HeadBodyDividePredictorPallas:
    """JAX/Pallas port of HeadBodyDividePredictor (inference)."""

    def __init__(self, in_dim, head_nums, scale=1, key=None):
        assert in_dim % head_nums == 0
        self.in_dim = in_dim
        self.att_dim = in_dim
        self.head_nums = head_nums
        self.scale = scale
        key = jax.random.PRNGKey(0) if key is None else key
        ks = jax.random.split(key, 10)
        C, A = in_dim, self.att_dim

        def init(k, shape):
            return (0.1 * jax.random.normal(k, shape)).astype(jnp.float32)

        # SALayer: Conv1d(C, A, 1) x3, Conv1d(A, C, 1); classifier Conv1d(C, 1, 1).
        # Weights stored pre-transposed as [C_in, C_out] matmul matrices.
        self.params = {
            "wq": init(ks[0], (C, A)), "bq": init(ks[1], (1, A)),
            "wk": init(ks[2], (C, A)), "bk": init(ks[3], (1, A)),
            "wv": init(ks[4], (C, A)), "bv": init(ks[5], (1, A)),
            "wo": init(ks[6], (A, C)), "bo": init(ks[7], (1, C)),
            "wc": init(ks[8], (1, C)), "bc": init(ks[9], (1, 1)),
        }
        # Fused / folded kernel parameters (packed once at construction time).
        self.w_all, self.b_all = _pack_params(self.params, head_nums)

    def align_segments_feat(self, segments_feat):
        B = len(segments_feat)
        N = max(sf.shape[1] for sf in segments_feat)
        C = segments_feat[0].shape[0]
        x = jnp.zeros((B, N, C), jnp.float32)        # kernel layout [B, N, C]
        masks = jnp.zeros((B, N), jnp.float32)
        for b, sf in enumerate(segments_feat):
            n = sf.shape[1]
            if n > 0:
                x = x.at[b, :n, :].set(sf.T.astype(jnp.float32))
                masks = masks.at[b, :n].set(1.0)
        return x, masks

    def __call__(self, feats, segments):
        segments = [[int(s * self.scale) for s in seg] for seg in segments]
        segments_feat = [
            f[:, jnp.asarray(seg, dtype=jnp.int32)] if len(seg) > 0 else f[:, :0]
            for f, seg in zip(feats, segments)
        ]
        if len(segments_feat) == 0 or segments_feat[0].shape[-1] == 0:
            return [0] * len(segments), {}, {}

        x_bnc, masks = self.align_segments_feat(segments_feat)
        logits, preds = _pallas_forward(x_bnc, masks, self.w_all, self.b_all,
                                        self.head_nums, self.att_dim)

        result_info = {}                              # training-only fields omitted
        ext_info = {"divide_logits": logits, "x_bnc": x_bnc, "masks": masks}
        divide_preds = jax.device_get(preds).astype(np.int64).tolist()
        return divide_preds, result_info, ext_info


# ---------------------------------------------------------------------------
# Demo / self-check
# ---------------------------------------------------------------------------
if __name__ == "__main__":
    in_dim, head_nums, T = 32, 4, 16
    key = jax.random.PRNGKey(0)
    k_model, k_f0, k_f1 = jax.random.split(key, 3)

    model = HeadBodyDividePredictorPallas(in_dim=in_dim, head_nums=head_nums,
                                          scale=1, key=k_model)

    # feats: list of per-sample [C, T] feature maps (PyTorch feats_pi layout).
    feats = [jax.random.normal(k_f0, (in_dim, T), jnp.float32),
             jax.random.normal(k_f1, (in_dim, T), jnp.float32)]
    # ragged segment index lists (second sample shorter -> exercises padding/mask).
    segments = [[1, 3, 5, 7, 9, 11, 13, 15], [0, 2, 4, 6, 8]]

    preds, result_info, ext_info = model(feats, segments)
    logits = jax.block_until_ready(ext_info["divide_logits"])

    # Sanity check against a pure-JAX reference of the same math (unfused).
    ref_logits, ref_preds = _reference_forward(ext_info["x_bnc"], ext_info["masks"],
                                               model.params, head_nums)
    np.testing.assert_allclose(np.asarray(logits), np.asarray(ref_logits),
                               rtol=2e-3, atol=2e-3)
    assert preds == jax.device_get(ref_preds).tolist()

    print("KERNEL_OK")
</pallas_src>

<mosaic_0001>
module attributes {stable_mosaic.version = 11 : i64} {
  func.func @_divide_predictor_kernel(%arg0: i32, %arg1: memref<2x8x32xf32, #tpu.memory_space<vmem>>, %arg2: memref<2x1x8xf32, #tpu.memory_space<vmem>>, %arg3: memref<32x69xf32, #tpu.memory_space<vmem>>, %arg4: memref<1x69xf32, #tpu.memory_space<vmem>>, %arg5: memref<2x8xf32, #tpu.memory_space<vmem>>, %arg6: memref<2x1xi32, #tpu.memory_space<vmem>>) attributes {dimension_semantics = [#tpu.dimension_semantics<parallel>], iteration_bounds = array<i64: 1>, scalar_prefetch = 0 : i64, scratch_operands = 0 : i64, tpu.core_type = #tpu.core_type<tc>, window_params = [{transform_indices = @transform_0, window_bounds = array<i64: 2, 8, 32>}, {transform_indices = @transform_1, window_bounds = array<i64: 2, 1, 8>}, {pipeline_mode = #tpu.pipeline_mode<synchronous>, transform_indices = @transform_2, window_bounds = array<i64: 32, 69>}, {pipeline_mode = #tpu.pipeline_mode<synchronous>, transform_indices = @transform_3, window_bounds = array<i64: 1, 69>}, {transform_indices = @transform_4, window_bounds = array<i64: 2, 8>}, {transform_indices = @transform_5, window_bounds = array<i64: 2, 1>}]} {
    %c0 = arith.constant 0 : index
    %c0_0 = arith.constant 0 : index
    %c0_1 = arith.constant 0 : index
    %0 = vector.load %arg1[%c0, %c0_0, %c0_1] : memref<2x8x32xf32, #tpu.memory_space<vmem>>, vector<2x8x32xf32>
    %1 = vector.shape_cast %0 : vector<2x8x32xf32> to vector<16x32xf32>
    %c0_2 = arith.constant 0 : index
    %c0_3 = arith.constant 0 : index
    %2 = vector.load %arg3[%c0_2, %c0_3] : memref<32x69xf32, #tpu.memory_space<vmem>>, vector<32x69xf32>
    %cst = arith.constant dense<0.000000e+00> : vector<16x69xf32>
    %3 = tpu.matmul %1, %2, %cst {dimension_numbers = #tpu.dot_dimension_numbers<[1], [0], [0], [1], [0, 0, 1, 1], [], []>} : vector<16x32xf32>, vector<32x69xf32>, vector<16x69xf32> -> vector<16x69xf32>
    %c0_4 = arith.constant 0 : index
    %c0_5 = arith.constant 0 : index
    %4 = vector.load %arg4[%c0_4, %c0_5] : memref<1x69xf32, #tpu.memory_space<vmem>>, vector<1x69xf32>
    %5 = vector.broadcast %4 : vector<1x69xf32> to vector<16x69xf32>
    %6 = arith.addf %3, %5 : vector<16x69xf32>
    %7 = vector.shape_cast %6 : vector<16x69xf32> to vector<2x8x69xf32>
    %c0_6 = arith.constant 0 : index
    %c0_7 = arith.constant 0 : index
    %c0_8 = arith.constant 0 : index
    %8 = vector.load %arg2[%c0_6, %c0_7, %c0_8] : memref<2x1x8xf32, #tpu.memory_space<vmem>>, vector<2x1x8xf32>
    %cst_9 = arith.constant 1.000000e+00 : f32
    %9 = vector.broadcast %cst_9 : f32 to vector<2x1x8xf32>
    %10 = arith.subf %9, %8 : vector<2x1x8xf32>
    %cst_10 = arith.constant -1.000000e+09 : f32
    %11 = vector.broadcast %cst_10 : f32 to vector<2x1x8xf32>
    %12 = arith.mulf %10, %11 : vector<2x1x8xf32>
    %13 = vector.extract_strided_slice %7 {offsets = [0, 0, 68], sizes = [2, 8, 1], strides = [1, 1, 1]} : vector<2x8x69xf32> to vector<2x8x1xf32>
    %14 = vector.extract_strided_slice %7 {offsets = [0, 0, 0], sizes = [2, 8, 8], strides = [1, 1, 1]} : vector<2x8x69xf32> to vector<2x8x8xf32>
    %15 = vector.extract_strided_slice %7 {offsets = [0, 0, 32], sizes = [2, 8, 8], strides = [1, 1, 1]} : vector<2x8x69xf32> to vector<2x8x8xf32>
    %16 = vector.extract_strided_slice %7 {offsets = [0, 0, 64], sizes = [2, 8, 1], strides = [1, 1, 1]} : vector<2x8x69xf32> to vector<2x8x1xf32>
    "tpu.trace_start"() <{level = 10 : i32, message = "bnd,bmd->bnm"}> : () -> ()
    %cst_11 = arith.constant dense<0.000000e+00> : vector<2x8x8xf32>
    %17 = tpu.matmul %14, %15, %cst_11 {dimension_numbers = #tpu.dot_dimension_numbers<[2], [2], [1], [1], [0, 0, 0, 1, 1, 1], [0], [0]>} : vector<2x8x8xf32>, vector<2x8x8xf32>, vector<2x8x8xf32> -> vector<2x8x8xf32>
    "tpu.trace_stop"() : () -> ()
    %cst_12 = arith.constant 0.353553385 : f32
    %18 = vector.broadcast %cst_12 : f32 to vector<2x8x8xf32>
    %19 = arith.mulf %17, %18 : vector<2x8x8xf32>
    %20 = vector.broadcast %12 : vector<2x1x8xf32> to vector<2x8x8xf32>
    %21 = arith.addf %19, %20 : vector<2x8x8xf32>
    %cst_13 = arith.constant dense<0xFF800000> : vector<2x8xf32>
    %22 = vector.multi_reduction <maximumf>, %21, %cst_13 [2] : vector<2x8x8xf32> to vector<2x8xf32>
    %23 = vector.shape_cast %22 : vector<2x8xf32> to vector<2x8x1xf32>
    %24 = vector.broadcast %23 : vector<2x8x1xf32> to vector<2x8x8xf32>
    %25 = arith.subf %21, %24 : vector<2x8x8xf32>
    %26 = math.exp %25 : vector<2x8x8xf32>
    %cst_14 = arith.constant dense<0.000000e+00> : vector<2x8xf32>
    %27 = vector.multi_reduction <add>, %26, %cst_14 [2] : vector<2x8x8xf32> to vector<2x8xf32>
    %28 = vector.shape_cast %27 : vector<2x8xf32> to vector<2x8x1xf32>
    %29 = vector.broadcast %28 : vector<2x8x1xf32> to vector<2x8x8xf32>
    %30 = arith.divf %26, %29 : vector<2x8x8xf32>
    "tpu.trace_start"() <{level = 10 : i32, message = "bnm,bmo->bno"}> : () -> ()
    %cst_15 = arith.constant dense<0.000000e+00> : vector<2x8x1xf32>
    %31 = tpu.matmul %30, %16, %cst_15 {dimension_numbers = #tpu.dot_dimension_numbers<[2], [1], [1], [2], [0, 0, 0, 1, 1, 2], [0], [0]>} : vector<2x8x8xf32>, vector<2x8x1xf32>, vector<2x8x1xf32> -> vector<2x8x1xf32>
    "tpu.trace_stop"() : () -> ()
    %32 = arith.addf %13, %31 : vector<2x8x1xf32>
    %33 = vector.extract_strided_slice %7 {offsets = [0, 0, 8], sizes = [2, 8, 8], strides = [1, 1, 1]} : vector<2x8x69xf32> to vector<2x8x8xf32>
    %34 = vector.extract_strided_slice %7 {offsets = [0, 0, 40], sizes = [2, 8, 8], strides = [1, 1, 1]} : vector<2x8x69xf32> to vector<2x8x8xf32>
    %35 = vector.extract_strided_slice %7 {offsets = [0, 0, 65], sizes = [2, 8, 1], strides = [1, 1, 1]} : vector<2x8x69xf32> to vector<2x8x1xf32>
    "tpu.trace_start"() <{level = 10 : i32, message = "bnd,bmd->bnm"}> : () -> ()
    %cst_16 = arith.constant dense<0.000000e+00> : vector<2x8x8xf32>
    %36 = tpu.matmul %33, %34, %cst_16 {dimension_numbers = #tpu.dot_dimension_numbers<[2], [2], [1], [1], [0, 0, 0, 1, 1, 1], [0], [0]>} : vector<2x8x8xf32>, vector<2x8x8xf32>, vector<2x8x8xf32> -> vector<2x8x8xf32>
    "tpu.trace_stop"() : () -> ()
    %cst_17 = arith.constant 0.353553385 : f32
    %37 = vector.broadcast %cst_17 : f32 to vector<2x8x8xf32>
    %38 = arith.mulf %36, %37 : vector<2x8x8xf32>
    %39 = vector.broadcast %12 : vector<2x1x8xf32> to vector<2x8x8xf32>
    %40 = arith.addf %38, %39 : vector<2x8x8xf32>
    %cst_18 = arith.constant dense<0xFF800000> : vector<2x8xf32>
    %41 = vector.multi_reduction <maximumf>, %40, %cst_18 [2] : vector<2x8x8xf32> to vector<2x8xf32>
    %42 = vector.shape_cast %41 : vector<2x8xf32> to vector<2x8x1xf32>
    %43 = vector.broadcast %42 : vector<2x8x1xf32> to vector<2x8x8xf32>
    %44 = arith.subf %40, %43 : vector<2x8x8xf32>
    %45 = math.exp %44 : vector<2x8x8xf32>
    %cst_19 = arith.constant dense<0.000000e+00> : vector<2x8xf32>
    %46 = vector.multi_reduction <add>, %45, %cst_19 [2] : vector<2x8x8xf32> to vector<2x8xf32>
    %47 = vector.shape_cast %46 : vector<2x8xf32> to vector<2x8x1xf32>
    %48 = vector.broadcast %47 : vector<2x8x1xf32> to vector<2x8x8xf32>
    %49 = arith.divf %45, %48 : vector<2x8x8xf32>
    "tpu.trace_start"() <{level = 10 : i32, message = "bnm,bmo->bno"}> : () -> ()
    %cst_20 = arith.constant dense<0.000000e+00> : vector<2x8x1xf32>
    %50 = tpu.matmul %49, %35, %cst_20 {dimension_numbers = #tpu.dot_dimension_numbers<[2], [1], [1], [2], [0, 0, 0, 1, 1, 2], [0], [0]>} : vector<2x8x8xf32>, vector<2x8x1xf32>, vector<2x8x1xf32> -> vector<2x8x1xf32>
    "tpu.trace_stop"() : () -> ()
    %51 = arith.addf %32, %50 : vector<2x8x1xf32>
    %52 = vector.extract_strided_slice %7 {offsets = [0, 0, 16], sizes = [2, 8, 8], strides = [1, 1, 1]} : vector<2x8x69xf32> to vector<2x8x8xf32>
    %53 = vector.extract_strided_slice %7 {offsets = [0, 0, 48], sizes = [2, 8, 8], strides = [1, 1, 1]} : vector<2x8x69xf32> to vector<2x8x8xf32>
    %54 = vector.extract_strided_slice %7 {offsets = [0, 0, 66], sizes = [2, 8, 1], strides = [1, 1, 1]} : vector<2x8x69xf32> to vector<2x8x1xf32>
    "tpu.trace_start"() <{level = 10 : i32, message = "bnd,bmd->bnm"}> : () -> ()
    %cst_21 = arith.constant dense<0.000000e+00> : vector<2x8x8xf32>
    %55 = tpu.matmul %52, %53, %cst_21 {dimension_numbers = #tpu.dot_dimension_numbers<[2], [2], [1], [1], [0, 0, 0, 1, 1, 1], [0], [0]>} : vector<2x8x8xf32>, vector<2x8x8xf32>, vector<2x8x8xf32> -> vector<2x8x8xf32>
    "tpu.trace_stop"() : () -> ()
    %cst_22 = arith.constant 0.353553385 : f32
    %56 = vector.broadcast %cst_22 : f32 to vector<2x8x8xf32>
    %57 = arith.mulf %55, %56 : vector<2x8x8xf32>
    %58 = vector.broadcast %12 : vector<2x1x8xf32> to vector<2x8x8xf32>
    %59 = arith.addf %57, %58 : vector<2x8x8xf32>
    %cst_23 = arith.constant dense<0xFF800000> : vector<2x8xf32>
    %60 = vector.multi_reduction <maximumf>, %59, %cst_23 [2] : vector<2x8x8xf32> to vector<2x8xf32>
    %61 = vector.shape_cast %60 : vector<2x8xf32> to vector<2x8x1xf32>
    %62 = vector.broadcast %61 : vector<2x8x1xf32> to vector<2x8x8xf32>
    %63 = arith.subf %59, %62 : vector<2x8x8xf32>
    %64 = math.exp %63 : vector<2x8x8xf32>
    %cst_24 = arith.constant dense<0.000000e+00> : vector<2x8xf32>
    %65 = vector.multi_reduction <add>, %64, %cst_24 [2] : vector<2x8x8xf32> to vector<2x8xf32>
    %66 = vector.shape_cast %65 : vector<2x8xf32> to vector<2x8x1xf32>
    %67 = vector.broadcast %66 : vector<2x8x1xf32> to vector<2x8x8xf32>
    %68 = arith.divf %64, %67 : vector<2x8x8xf32>
    "tpu.trace_start"() <{level = 10 : i32, message = "bnm,bmo->bno"}> : () -> ()
    %cst_25 = arith.constant dense<0.000000e+00> : vector<2x8x1xf32>
    %69 = tpu.matmul %68, %54, %cst_25 {dimension_numbers = #tpu.dot_dimension_numbers<[2], [1], [1], [2], [0, 0, 0, 1, 1, 2], [0], [0]>} : vector<2x8x8xf32>, vector<2x8x1xf32>, vector<2x8x1xf32> -> vector<2x8x1xf32>
    "tpu.trace_stop"() : () -> ()
    %70 = arith.addf %51, %69 : vector<2x8x1xf32>
    %71 = vector.extract_strided_slice %7 {offsets = [0, 0, 24], sizes = [2, 8, 8], strides = [1, 1, 1]} : vector<2x8x69xf32> to vector<2x8x8xf32>
    %72 = vector.extract_strided_slice %7 {offsets = [0, 0, 56], sizes = [2, 8, 8], strides = [1, 1, 1]} : vector<2x8x69xf32> to vector<2x8x8xf32>
    %73 = vector.extract_strided_slice %7 {offsets = [0, 0, 67], sizes = [2, 8, 1], strides = [1, 1, 1]} : vector<2x8x69xf32> to vector<2x8x1xf32>
    "tpu.trace_start"() <{level = 10 : i32, message = "bnd,bmd->bnm"}> : () -> ()
    %cst_26 = arith.constant dense<0.000000e+00> : vector<2x8x8xf32>
    %74 = tpu.matmul %71, %72, %cst_26 {dimension_numbers = #tpu.dot_dimension_numbers<[2], [2], [1], [1], [0, 0, 0, 1, 1, 1], [0], [0]>} : vector<2x8x8xf32>, vector<2x8x8xf32>, vector<2x8x8xf32> -> vector<2x8x8xf32>
    "tpu.trace_stop"() : () -> ()
    %cst_27 = arith.constant 0.353553385 : f32
    %75 = vector.broadcast %cst_27 : f32 to vector<2x8x8xf32>
    %76 = arith.mulf %74, %75 : vector<2x8x8xf32>
    %77 = vector.broadcast %12 : vector<2x1x8xf32> to vector<2x8x8xf32>
    %78 = arith.addf %76, %77 : vector<2x8x8xf32>
    %cst_28 = arith.constant dense<0xFF800000> : vector<2x8xf32>
    %79 = vector.multi_reduction <maximumf>, %78, %cst_28 [2] : vector<2x8x8xf32> to vector<2x8xf32>
    %80 = vector.shape_cast %79 : vector<2x8xf32> to vector<2x8x1xf32>
    %81 = vector.broadcast %80 : vector<2x8x1xf32> to vector<2x8x8xf32>
    %82 = arith.subf %78, %81 : vector<2x8x8xf32>
    %83 = math.exp %82 : vector<2x8x8xf32>
    %cst_29 = arith.constant dense<0.000000e+00> : vector<2x8xf32>
    %84 = vector.multi_reduction <add>, %83, %cst_29 [2] : vector<2x8x8xf32> to vector<2x8xf32>
    %85 = vector.shape_cast %84 : vector<2x8xf32> to vector<2x8x1xf32>
    %86 = vector.broadcast %85 : vector<2x8x1xf32> to vector<2x8x8xf32>
    %87 = arith.divf %83, %86 : vector<2x8x8xf32>
    "tpu.trace_start"() <{level = 10 : i32, message = "bnm,bmo->bno"}> : () -> ()
    %cst_30 = arith.constant dense<0.000000e+00> : vector<2x8x1xf32>
    %88 = tpu.matmul %87, %73, %cst_30 {dimension_numbers = #tpu.dot_dimension_numbers<[2], [1], [1], [2], [0, 0, 0, 1, 1, 2], [0], [0]>} : vector<2x8x8xf32>, vector<2x8x1xf32>, vector<2x8x1xf32> -> vector<2x8x1xf32>
    "tpu.trace_stop"() : () -> ()
    %89 = arith.addf %70, %88 : vector<2x8x1xf32>
    %90 = tpu.transpose %89, [0, 2, 1] : vector<2x8x1xf32> -> vector<2x1x8xf32>
    %91 = vector.shape_cast %90 : vector<2x1x8xf32> to vector<2x8xf32>
    %92 = vector.shape_cast %8 : vector<2x1x8xf32> to vector<2x8xf32>
    %cst_31 = arith.constant 1.000000e+00 : f32
    %93 = vector.broadcast %cst_31 : f32 to vector<2x8xf32>
    %94 = arith.subf %92, %93 : vector<2x8xf32>
    %cst_32 = arith.constant 1.000000e+08 : f32
    %95 = vector.broadcast %cst_32 : f32 to vector<2x8xf32>
    %96 = arith.mulf %94, %95 : vector<2x8xf32>
    %97 = arith.addf %91, %96 : vector<2x8xf32>
    %c0_33 = arith.constant 0 : index
    %c0_34 = arith.constant 0 : index
    %98 = vector.load %arg5[%c0_33, %c0_34] : memref<2x8xf32, #tpu.memory_space<vmem>>, vector<2x8xf32>
    tpu.vector_store %arg5[%c0_33, %c0_34], %97 {strides = array<i32>} : memref<2x8xf32, #tpu.memory_space<vmem>>, vector<2x8xf32>,
    %99 = tpu.iota {dimensions = array<i32: 1>} : vector<2x8xi32>
    %cst_35 = arith.constant dense<0xFF800000> : vector<2xf32>
    %100 = vector.multi_reduction <maximumf>, %97, %cst_35 [1] : vector<2x8xf32> to vector<2xf32>
    %101 = vector.shape_cast %100 : vector<2xf32> to vector<2x1xf32>
    %102 = vector.broadcast %101 : vector<2x1xf32> to vector<2x8xf32>
    %103 = arith.cmpf oge, %97, %102 : vector<2x8xf32>
    %c8_i32 = arith.constant 8 : i32
    %104 = vector.broadcast %c8_i32 : i32 to vector<2x8xi32>
    %105 = arith.select %103, %99, %104 : vector<2x8xi1>, vector<2x8xi32>
    %cst_36 = arith.constant dense<2147483647> : vector<2xi32>
    %106 = vector.multi_reduction <minsi>, %105, %cst_36 [1] : vector<2x8xi32> to vector<2xi32>
    %107 = vector.shape_cast %106 : vector<2xi32> to vector<2x1xi32>
    %c0_37 = arith.constant 0 : index
    %c0_38 = arith.constant 0 : index
    %108 = vector.load %arg6[%c0_37, %c0_38] : memref<2x1xi32, #tpu.memory_space<vmem>>, vector<2x1xi32>
    tpu.vector_store %arg6[%c0_37, %c0_38], %107 {strides = array<i32>} : memref<2x1xi32, #tpu.memory_space<vmem>>, vector<2x1xi32>,
    return
  }
  func.func @transform_0(%arg0: i32) -> (i32, i32, i32) {
    %c0_i32 = arith.constant 0 : i32
    %c0_i32_0 = arith.constant 0 : i32
    %c0_i32_1 = arith.constant 0 : i32
    return %arg0, %c0_i32, %c0_i32_0 : i32, i32, i32
  }
  func.func @transform_1(%arg0: i32) -> (i32, i32, i32) {
    %c0_i32 = arith.constant 0 : i32
    %c0_i32_0 = arith.constant 0 : i32
    %c0_i32_1 = arith.constant 0 : i32
    return %arg0, %c0_i32, %c0_i32_0 : i32, i32, i32
  }
  func.func @transform_2(%arg0: i32) -> (i32, i32) {
    %c0_i32 = arith.constant 0 : i32
    %c0_i32_0 = arith.constant 0 : i32
    %c0_i32_1 = arith.constant 0 : i32
    return %c0_i32, %c0_i32_0 : i32, i32
  }
  func.func @transform_3(%arg0: i32) -> (i32, i32) {
    %c0_i32 = arith.constant 0 : i32
    %c0_i32_0 = arith.constant 0 : i32
    %c0_i32_1 = arith.constant 0 : i32
    return %c0_i32, %c0_i32_0 : i32, i32
  }
  func.func @transform_4(%arg0: i32) -> (i32, i32) {
    %c0_i32 = arith.constant 0 : i32
    %c0_i32_0 = arith.constant 0 : i32
    return %arg0, %c0_i32 : i32, i32
  }
  func.func @transform_5(%arg0: i32) -> (i32, i32) {
    %c0_i32 = arith.constant 0 : i32
    %c0_i32_0 = arith.constant 0 : i32
    return %arg0, %c0_i32 : i32, i32
  }
}

</mosaic_0001>

<llo_original>
// kernel: tpu_custom_call.1
$region0: #{tpu_custom_call.1}
  #allocation0 [shape = 'u32[]', space=smem, size = 0x4, offset = 0x4, fixed_abs, tag = 'smem constant byte address 0x4 - core index']
  #allocation1 [shape = 'u32[72,128]{1,0:T(1,128)}', space=vmem, size = 0x9000, scoped, tag = 'internal scratch']
  %s0 = inlined_call_operand.hbm [shape: f32[2,8,32], index: 0, kind: input, shape index: {}]
  %s1 = inlined_call_operand.hbm [shape: f32[2,1,8], index: 1, kind: input, shape index: {}]
  %s2 = inlined_call_operand.hbm [shape: f32[32,69], index: 2, kind: input, shape index: {}]
  %s3 = inlined_call_operand.vmem [shape: f32[1,69], index: 3, kind: input, shape index: {}]
  %s4 = inlined_call_operand.hbm [shape: f32[2,8], index: 4, kind: output, shape index: {0}]
  %s5 = inlined_call_operand.vmem [shape: s32[2,1], index: 5, kind: output, shape index: {1}]
  %6 = xla_tuple %s4, %s5
  %s7 = sld [smem:[#allocation0]]
  $region46: #{tpu_custom_call.1} parent=0
    _
  %s9 = ssub.s32 1, %s7
  %s10 = scalar_select 0, %s9, %s7
  $region1: #{tpu_custom_call.1} parent=0
    #allocation2 [shape = 'u8[8192]{0}', space=vmem, size = 0x2000, scoped, tag = 'input window, operand 0, single buffered']
    #allocation3 [shape = 's32[1]{0}', space=sflag, size = 0x4, scoped, tag = 'scoped memory for tpu_custom_call.1']
    #allocation4 [shape = 's32[1]{0}', space=sflag, size = 0x4, scoped, tag = 'scoped memory for tpu_custom_call.1']
    #allocation5 [shape = 'u8[1024]{0}', space=vmem, size = 0x400, scoped, tag = 'input window, operand 1, single buffered']
    #allocation6 [shape = 's32[1]{0}', space=sflag, size = 0x4, scoped, tag = 'scoped memory for tpu_custom_call.1']
    #allocation7 [shape = 'u8[16384]{0}', space=vmem, size = 0x4000, scoped, tag = 'input window, operand 2, single buffered']
    #allocation8 [shape = 'u8[1024]{0}', space=vmem, size = 0x400, scoped, tag = 'output window, operand 0, single buffered']
    %11 = vsyncpa [#allocation3], 0
    %12 = vsyncpa [#allocation6], 0
    %13 = vsyncpa [#allocation4], 0
    // Predicated region
    $region2: #{tpu_custom_call.1} parent=1 // pred_check
      _
    $region3: #{tpu_custom_call.1} parent=1 // pred_check_branch
      %15 = sbr.rel (0) target = $region5
    $region4: #{tpu_custom_call.1} parent=1 // pred_region
      %17 = vsyncadd [#allocation3], 0
      %s18 = sshll.u32 %s0, 4
      %s19 = int_to_ptr.hbm [resolvable:$true] %s18
      %s20 = sshll.u32 [#allocation2], 4
      %s21 = int_to_ptr.vmem [resolvable:$true] %s20
      %26 = dma.hbm_to_vmem [thread:$0]  %s19, 256, %s21, [#allocation3], 128, 128, 8
    $region5: #{tpu_custom_call.1} parent=1 // pred_fallthru
      _
    // Predicated region
    $region6: #{tpu_custom_call.1} parent=1 // pred_check
      _
    $region7: #{tpu_custom_call.1} parent=1 // pred_check_branch
      %28 = sbr.rel (0) target = $region9
    $region8: #{tpu_custom_call.1} parent=1 // pred_region
      %30 = vsyncadd [#allocation6], 0
      %s31 = sshll.u32 %s1, 4
      %s32 = int_to_ptr.hbm [resolvable:$true] %s31
      %s33 = sshll.u32 [#allocation5], 4
      %s34 = int_to_ptr.vmem [resolvable:$true] %s33
      %39 = dma.hbm_to_vmem [thread:$0]  %s32, 32, %s34, [#allocation6], 16, 16, 1
    $region9: #{tpu_custom_call.1} parent=1 // pred_fallthru
      _
    // Predicated region
    $region10: #{tpu_custom_call.1} parent=1 // pred_check
      _
    $region11: #{tpu_custom_call.1} parent=1 // pred_check_branch
      %41 = sbr.rel (0) target = $region13
    $region12: #{tpu_custom_call.1} parent=1 // pred_region
      %43 = vsyncadd [#allocation6], 0
      %s44 = sshll.u32 %s2, 4
      %s45 = int_to_ptr.hbm [resolvable:$true] %s44
      %s46 = sshll.u32 [#allocation7], 4
      %s47 = int_to_ptr.vmem [resolvable:$true] %s46
      %52 = dma.hbm_to_vmem [thread:$0]  %s45, 512, %s47, [#allocation6], 128, 128, 8
    $region13: #{tpu_custom_call.1} parent=1 // pred_fallthru
      _
    // Predicated region
    $region14: #{tpu_custom_call.1} parent=1 // pred_check
      _
    $region15: #{tpu_custom_call.1} parent=1 // pred_check_branch
      %54 = sbr.rel (0) target = $region17
    $region16: #{tpu_custom_call.1} parent=1 // pred_region
      _
    $region17: #{tpu_custom_call.1} parent=1 // pred_fallthru
      _
    // Predicated region
    $region18: #{tpu_custom_call.1} parent=1 // pred_check
      _
    $region19: #{tpu_custom_call.1} parent=1 // pred_check_branch
      %56 = sbr.rel (0) target = $region21
    $region20: #{tpu_custom_call.1} parent=1 // pred_region
      %58 = dma.done [#allocation3], 256
    $region21: #{tpu_custom_call.1} parent=1 // pred_fallthru
      _
    // Predicated region
    $region22: #{tpu_custom_call.1} parent=1 // pred_check
      _
    $region23: #{tpu_custom_call.1} parent=1 // pred_check_branch
      %60 = sbr.rel (0) target = $region25
    $region24: #{tpu_custom_call.1} parent=1 // pred_region
      %62 = dma.done [#allocation6], 32
    $region25: #{tpu_custom_call.1} parent=1 // pred_fallthru
      _
    // Predicated region
    $region26: #{tpu_custom_call.1} parent=1 // pred_check
      _
    $region27: #{tpu_custom_call.1} parent=1 // pred_check_branch
      %64 = sbr.rel (0) target = $region29
    $region28: #{tpu_custom_call.1} parent=1 // pred_region
      %66 = dma.done [#allocation6], 512
    $region29: #{tpu_custom_call.1} parent=1 // pred_fallthru
      _
    %v67 = vld [vmem:[#allocation2] sm:$0xff]
    %v68 = vld [vmem:[#allocation2 + $0x8] sm:$0xff]
    %v69 = vld [vmem:[#allocation7] sm:$0xff]
    %v70 = vld [vmem:[#allocation7 + $0x8] sm:$0xff]
    %v71 = vld [vmem:[#allocation7 + $0x10] sm:$0xff]
    %v72 = vld [vmem:[#allocation7 + $0x18] sm:$0xff]
    %v73 = vld [vmem:[%s3] sm:$0x1]
    %v75 = vperm.slane %v73, 0
    %vm77 = vcmask 261120
    %v79 = vsel %vm77, %v67, 0
    %v82 = vsel %vm77, %v68, 0
    %84 = vmatpush.msra.mxu0 0.0
    %85 = vmatpush.msra.mxu0 0.0
    %86 = vmatpush.msra.mxu0 0.0
    %87 = vmatpush.msra.mxu0 0.0
    %88 = vmatpush.msra.mxu0 0.0
    %89 = vmatpush.msra.mxu0 0.0
    %90 = vmatpush.msra.mxu0 0.0
    %91 = vmatpush.msra.mxu0 0.0
    %92 = vmatpush.msra.mxu0 0.0
    %93 = vmatpush.msra.mxu0 0.0
    %94 = vmatpush.msra.mxu0 0.0
    %95 = vmatpush.msra.mxu0 0.0
    %96 = vmatpush.msra.mxu0 %v72
    %97 = vmatpush.msra.mxu0 %v71
    %98 = vmatpush.msra.mxu0 %v70
    %99 = vmatpush.msra.mxu0 %v69
    %100 = vmatmul.f32.gmra.mxu0 %v79
    %v101 = vpop.f32.mrf.mxu0
    %v102 = vadd.f32 %v75, %v101
    %103 = vmatmul.f32.gmra.mxu0 %v82
    %v104 = vpop.f32.mrf.mxu0
    %v105 = vadd.f32 %v75, %v104
    %106 = vdwg.mxu0
    %v107 = vld [vmem:[#allocation5] sm:$0x1]
    %v108 = vld [vmem:[#allocation5 + $0x1] sm:$0x1]
    %v109 = vsub.f32 1.0, %v107
    %v110 = vsub.f32 1.0, %v108
    %v111 = vmul.f32 %v109, -1e+09
    %v112 = vmul.f32 %v110, -1e+09
    %114 = vrot.lane.b32.xlu0 %v102, 96
    %v115 = vpop.permute.xlu0 %114
    %vm116 = vcmask 64512
    %v117 = vsel %vm116, %v102, 0
    %v119 = vsel %vm116, %v115, 0
    %121 = vmatpush.xpose.msra.mxu0 0.0
    %122 = vmatpush.xpose.msra.mxu0 0.0
    %123 = vmatpush.xpose.msra.mxu0 0.0
    %124 = vmatpush.xpose.msra.mxu0 0.0
    %125 = vmatpush.xpose.msra.mxu0 0.0
    %126 = vmatpush.xpose.msra.mxu0 0.0
    %127 = vmatpush.xpose.msra.mxu0 0.0
    %128 = vmatpush.xpose.msra.mxu0 0.0
    %129 = vmatpush.xpose.msra.mxu0 0.0
    %130 = vmatpush.xpose.msra.mxu0 0.0
    %131 = vmatpush.xpose.msra.mxu0 0.0
    %132 = vmatpush.xpose.msra.mxu0 0.0
    %133 = vmatpush.xpose.msra.mxu0 0.0
    %134 = vmatpush.xpose.msra.mxu0 0.0
    %135 = vmatpush.xpose.msra.mxu0 0.0
    %136 = vmatpush.xpose.msra.mxu0 %v119
    %137 = vmatmul.f32.gmra.mxu0 %v117
    %v138 = vpop.f32.mrf.mxu0
    %v139 = vadd.f32 0.0, %v138
    %140 = vdwg.mxu0
    %142 = vrot.lane.b32.xlu0 %v105, 96
    %v143 = vpop.permute.xlu0 %142
    %v144 = vsel %vm116, %v105, 0
    %v146 = vsel %vm116, %v143, 0
    %148 = vmatpush.xpose.msra.mxu0 0.0
    %149 = vmatpush.xpose.msra.mxu0 0.0
    %150 = vmatpush.xpose.msra.mxu0 0.0
    %151 = vmatpush.xpose.msra.mxu0 0.0
    %152 = vmatpush.xpose.msra.mxu0 0.0
    %153 = vmatpush.xpose.msra.mxu0 0.0
    %154 = vmatpush.xpose.msra.mxu0 0.0
    %155 = vmatpush.xpose.msra.mxu0 0.0
    %156 = vmatpush.xpose.msra.mxu0 0.0
    %157 = vmatpush.xpose.msra.mxu0 0.0
    %158 = vmatpush.xpose.msra.mxu0 0.0
    %159 = vmatpush.xpose.msra.mxu0 0.0
    %160 = vmatpush.xpose.msra.mxu0 0.0
    %161 = vmatpush.xpose.msra.mxu0 0.0
    %162 = vmatpush.xpose.msra.mxu0 0.0
    %163 = vmatpush.xpose.msra.mxu0 %v146
    %164 = vmatmul.f32.gmra.mxu0 %v144
    %v165 = vpop.f32.mrf.mxu0
    %v166 = vadd.f32 0.0, %v165
    %167 = vdwg.mxu0
    %v168 = vmul.f32 %v139, 0.35355338
    %v169 = vmul.f32 %v166, 0.35355338
    %v172 = vperm.slane %v111, 0
    %v173 = vperm.slane %v112, 0
    %v176 = vadd.f32 %v168, %v172
    %v177 = vadd.f32 %v169, %v173
    %v178 = vsel %vm116, %v176, -inf
    %179 = vmax.xlane.f32.xlu0 %v178
    %v180 = vpop.xlane.xlu0 %179
    %v181 = vsel %vm116, %v177, -inf
    %182 = vmax.xlane.f32.xlu0 %v181
    %v183 = vpop.xlane.xlu0 %182
    %v184 = vsub.f32 %v176, %v180
    %v185 = vsub.f32 %v177, %v183
    %v186 = vmul.f32 %v184, 1.442695
    %v187 = vpow.pop %v186
    %v188 = vmul.f32 %v185, 1.442695
    %v189 = vpow.pop %v188
    %v190 = vsel %vm116, %v187, 0.0
    %191 = vadd.xlane.f32.xlu0 %v190
    %v192 = vpop.xlane.xlu0 %191
    %v193 = vsel %vm116, %v189, 0.0
    %194 = vadd.xlane.f32.xlu0 %v193
    %v195 = vpop.xlane.xlu0 %194
    %v196 = vrcp.pop %v192
    %v197 = vmul.f32 %v192, %v196
    %v198 = vsub.f32 1.0, %v197
    %v199 = vmul.f32 %v196, %v198
    %v200 = vadd.f32 %v196, %v199
    %vm201 = vweird.f32 %v192
    %vm202 = vweird.f32 %v196
    %vm203 = vmor %vm201, %vm202
    %v204 = vsel %vm203, %v196, %v200
    %v205 = vand.u32 2147483647, %v192
    %vm206 = vcmp.eq.f32.partialorder %v205, 8.507059e+37
    %v207 = vand.u32 %v192, 2147483648
    %v208 = vor.u32 1.1754944e-38, %v207
    %v209 = vsel %vm206, %v208, %v204
    %v210 = vmul.f32 %v187, %v209
    %v211 = vrcp.pop %v195
    %v212 = vmul.f32 %v195, %v211
    %v213 = vsub.f32 1.0, %v212
    %v214 = vmul.f32 %v211, %v213
    %v215 = vadd.f32 %v211, %v214
    %vm216 = vweird.f32 %v195
    %vm217 = vweird.f32 %v211
    %vm218 = vmor %vm216, %vm217
    %v219 = vsel %vm218, %v211, %v215
    %v220 = vand.u32 2147483647, %v195
    %vm221 = vcmp.eq.f32.partialorder %v220, 8.507059e+37
    %v222 = vand.u32 %v195, 2147483648
    %v223 = vor.u32 1.1754944e-38, %v222
    %v224 = vsel %vm221, %v223, %v219
    %v225 = vmul.f32 %v189, %v224
    %226 = vrot.lane.b32.xlu0 %v102, 64
    %v227 = vpop.permute.xlu0 %226
    %v230 = vsel %vm116, %v210, 0
    %232 = vmatpush.msra.mxu0 0.0
    %233 = vmatpush.msra.mxu0 0.0
    %234 = vmatpush.msra.mxu0 0.0
    %235 = vmatpush.msra.mxu0 0.0
    %236 = vmatpush.msra.mxu0 0.0
    %237 = vmatpush.msra.mxu0 0.0
    %238 = vmatpush.msra.mxu0 0.0
    %239 = vmatpush.msra.mxu0 0.0
    %240 = vmatpush.msra.mxu0 0.0
    %241 = vmatpush.msra.mxu0 0.0
    %242 = vmatpush.msra.mxu0 0.0
    %243 = vmatpush.msra.mxu0 0.0
    %244 = vmatpush.msra.mxu0 0.0
    %245 = vmatpush.msra.mxu0 0.0
    %246 = vmatpush.msra.mxu0 0.0
    %247 = vmatpush.msra.mxu0 %v227
    %248 = vmatmul.f32.gmra.mxu0 %v230
    %v249 = vpop.f32.mrf.mxu0
    %v250 = vadd.f32 0.0, %v249
    %251 = vdwg.mxu0
    %252 = vrot.lane.b32.xlu0 %v105, 64
    %v253 = vpop.permute.xlu0 %252
    %v256 = vsel %vm116, %v225, 0
    %258 = vmatpush.msra.mxu0 0.0
    %259 = vmatpush.msra.mxu0 0.0
    %260 = vmatpush.msra.mxu0 0.0
    %261 = vmatpush.msra.mxu0 0.0
    %262 = vmatpush.msra.mxu0 0.0
    %263 = vmatpush.msra.mxu0 0.0
    %264 = vmatpush.msra.mxu0 0.0
    %265 = vmatpush.msra.mxu0 0.0
    %266 = vmatpush.msra.mxu0 0.0
    %267 = vmatpush.msra.mxu0 0.0
    %268 = vmatpush.msra.mxu0 0.0
    %269 = vmatpush.msra.mxu0 0.0
    %270 = vmatpush.msra.mxu0 0.0
    %271 = vmatpush.msra.mxu0 0.0
    %272 = vmatpush.msra.mxu0 0.0
    %273 = vmatpush.msra.mxu0 %v253
    %274 = vmatmul.f32.gmra.mxu0 %v256
    %v275 = vpop.f32.mrf.mxu0
    %v276 = vadd.f32 0.0, %v275
    %277 = vdwg.mxu0
    %280 = vrot.lane.b32.xlu0 %v250, 68
    %v281 = vpop.permute.xlu0 %280
    %282 = vrot.lane.b32.xlu0 %v276, 68
    %v283 = vpop.permute.xlu0 %282
    %v286 = vadd.f32 %v102, %v281
    %v287 = vadd.f32 %v105, %v283
    %288 = vrot.lane.b32.xlu0 %v102, 120
    %v289 = vpop.permute.xlu0 %288
    %290 = vrot.lane.b32.xlu0 %v102, 88
    %v291 = vpop.permute.xlu0 %290
    %v292 = vsel %vm116, %v289, 0
    %v294 = vsel %vm116, %v291, 0
    %296 = vmatpush.xpose.msra.mxu0 0.0
    %297 = vmatpush.xpose.msra.mxu0 0.0
    %298 = vmatpush.xpose.msra.mxu0 0.0
    %299 = vmatpush.xpose.msra.mxu0 0.0
    %300 = vmatpush.xpose.msra.mxu0 0.0
    %301 = vmatpush.xpose.msra.mxu0 0.0
    %302 = vmatpush.xpose.msra.mxu0 0.0
    %303 = vmatpush.xpose.msra.mxu0 0.0
    %304 = vmatpush.xpose.msra.mxu0 0.0
    %305 = vmatpush.xpose.msra.mxu0 0.0
    %306 = vmatpush.xpose.msra.mxu0 0.0
    %307 = vmatpush.xpose.msra.mxu0 0.0
    %308 = vmatpush.xpose.msra.mxu0 0.0
    %309 = vmatpush.xpose.msra.mxu0 0.0
    %310 = vmatpush.xpose.msra.mxu0 0.0
    %311 = vmatpush.xpose.msra.mxu0 %v294
    %312 = vmatmul.f32.gmra.mxu0 %v292
    %v313 = vpop.f32.mrf.mxu0
    %v314 = vadd.f32 0.0, %v313
    %315 = vdwg.mxu0
    %316 = vrot.lane.b32.xlu0 %v105, 120
    %v317 = vpop.permute.xlu0 %316
    %318 = vrot.lane.b32.xlu0 %v105, 88
    %v319 = vpop.permute.xlu0 %318
    %v320 = vsel %vm116, %v317, 0
    %v322 = vsel %vm116, %v319, 0
    %324 = vmatpush.xpose.msra.mxu0 0.0
    %325 = vmatpush.xpose.msra.mxu0 0.0
    %326 = vmatpush.xpose.msra.mxu0 0.0
    %327 = vmatpush.xpose.msra.mxu0 0.0
    %328 = vmatpush.xpose.msra.mxu0 0.0
    %329 = vmatpush.xpose.msra.mxu0 0.0
    %330 = vmatpush.xpose.msra.mxu0 0.0
    %331 = vmatpush.xpose.msra.mxu0 0.0
    %332 = vmatpush.xpose.msra.mxu0 0.0
    %333 = vmatpush.xpose.msra.mxu0 0.0
    %334 = vmatpush.xpose.msra.mxu0 0.0
    %335 = vmatpush.xpose.msra.mxu0 0.0
    %336 = vmatpush.xpose.msra.mxu0 0.0
    %337 = vmatpush.xpose.msra.mxu0 0.0
    %338 = vmatpush.xpose.msra.mxu0 0.0
    %339 = vmatpush.xpose.msra.mxu0 %v322
    %340 = vmatmul.f32.gmra.mxu0 %v320
    %v341 = vpop.f32.mrf.mxu0
    %v342 = vadd.f32 0.0, %v341
    %343 = vdwg.mxu0
    %v344 = vmul.f32 %v314, 0.35355338
    %v345 = vmul.f32 %v342, 0.35355338
    %v346 = vadd.f32 %v344, %v172
    %v347 = vadd.f32 %v345, %v173
    %v348 = vsel %vm116, %v346, -inf
    %349 = vmax.xlane.f32.xlu0 %v348
    %v350 = vpop.xlane.xlu0 %349
    %v351 = vsel %vm116, %v347, -inf
    %352 = vmax.xlane.f32.xlu0 %v351
    %v353 = vpop.xlane.xlu0 %352
    %v354 = vsub.f32 %v346, %v350
    %v355 = vsub.f32 %v347, %v353
    %v356 = vmul.f32 %v354, 1.442695
    %v357 = vpow.pop %v356
    %v358 = vmul.f32 %v355, 1.442695
    %v359 = vpow.pop %v358
    %v360 = vsel %vm116, %v357, 0.0
    %361 = vadd.xlane.f32.xlu0 %v360
    %v362 = vpop.xlane.xlu0 %361
    %v363 = vsel %vm116, %v359, 0.0
    %364 = vadd.xlane.f32.xlu0 %v363
    %v365 = vpop.xlane.xlu0 %364
    %v366 = vrcp.pop %v362
    %v367 = vmul.f32 %v362, %v366
    %v368 = vsub.f32 1.0, %v367
    %v369 = vmul.f32 %v366, %v368
    %v370 = vadd.f32 %v366, %v369
    %vm371 = vweird.f32 %v362
    %vm372 = vweird.f32 %v366
    %vm373 = vmor %vm371, %vm372
    %v374 = vsel %vm373, %v366, %v370
    %v375 = vand.u32 2147483647, %v362
    %vm376 = vcmp.eq.f32.partialorder %v375, 8.507059e+37
    %v377 = vand.u32 %v362, 2147483648
    %v378 = vor.u32 1.1754944e-38, %v377
    %v379 = vsel %vm376, %v378, %v374
    %v380 = vmul.f32 %v357, %v379
    %v381 = vrcp.pop %v365
    %v382 = vmul.f32 %v365, %v381
    %v383 = vsub.f32 1.0, %v382
    %v384 = vmul.f32 %v381, %v383
    %v385 = vadd.f32 %v381, %v384
    %vm386 = vweird.f32 %v365
    %vm387 = vweird.f32 %v381
    %vm388 = vmor %vm386, %vm387
    %v389 = vsel %vm388, %v381, %v385
    %v390 = vand.u32 2147483647, %v365
    %vm391 = vcmp.eq.f32.partialorder %v390, 8.507059e+37
    %v392 = vand.u32 %v365, 2147483648
    %v393 = vor.u32 1.1754944e-38, %v392
    %v394 = vsel %vm391, %v393, %v389
    %v395 = vmul.f32 %v359, %v394
    %396 = vrot.lane.b32.xlu0 %v102, 63
    %v397 = vpop.permute.xlu0 %396
    %v400 = vsel %vm116, %v380, 0
    %402 = vmatpush.msra.mxu0 0.0
    %403 = vmatpush.msra.mxu0 0.0
    %404 = vmatpush.msra.mxu0 0.0
    %405 = vmatpush.msra.mxu0 0.0
    %406 = vmatpush.msra.mxu0 0.0
    %407 = vmatpush.msra.mxu0 0.0
    %408 = vmatpush.msra.mxu0 0.0
    %409 = vmatpush.msra.mxu0 0.0
    %410 = vmatpush.msra.mxu0 0.0
    %411 = vmatpush.msra.mxu0 0.0
    %412 = vmatpush.msra.mxu0 0.0
    %413 = vmatpush.msra.mxu0 0.0
    %414 = vmatpush.msra.mxu0 0.0
    %415 = vmatpush.msra.mxu0 0.0
    %416 = vmatpush.msra.mxu0 0.0
    %417 = vmatpush.msra.mxu0 %v397
    %418 = vmatmul.f32.gmra.mxu0 %v400
    %v419 = vpop.f32.mrf.mxu0
    %v420 = vadd.f32 0.0, %v419
    %421 = vdwg.mxu0
    %422 = vrot.lane.b32.xlu0 %v105, 63
    %v423 = vpop.permute.xlu0 %422
    %v426 = vsel %vm116, %v395, 0
    %428 = vmatpush.msra.mxu0 0.0
    %429 = vmatpush.msra.mxu0 0.0
    %430 = vmatpush.msra.mxu0 0.0
    %431 = vmatpush.msra.mxu0 0.0
    %432 = vmatpush.msra.mxu0 0.0
    %433 = vmatpush.msra.mxu0 0.0
    %434 = vmatpush.msra.mxu0 0.0
    %435 = vmatpush.msra.mxu0 0.0
    %436 = vmatpush.msra.mxu0 0.0
    %437 = vmatpush.msra.mxu0 0.0
    %438 = vmatpush.msra.mxu0 0.0
    %439 = vmatpush.msra.mxu0 0.0
    %440 = vmatpush.msra.mxu0 0.0
    %441 = vmatpush.msra.mxu0 0.0
    %442 = vmatpush.msra.mxu0 0.0
    %443 = vmatpush.msra.mxu0 %v423
    %444 = vmatmul.f32.gmra.mxu0 %v426
    %v445 = vpop.f32.mrf.mxu0
    %v446 = vadd.f32 0.0, %v445
    %447 = vdwg.mxu0
    %450 = vrot.lane.b32.xlu0 %v420, 68
    %v451 = vpop.permute.xlu0 %450
    %452 = vrot.lane.b32.xlu0 %v446, 68
    %v453 = vpop.permute.xlu0 %452
    %v456 = vadd.f32 %v286, %v451
    %v457 = vadd.f32 %v287, %v453
    %458 = vrot.lane.b32.xlu0 %v102, 112
    %v459 = vpop.permute.xlu0 %458
    %460 = vrot.lane.b32.xlu0 %v102, 80
    %v461 = vpop.permute.xlu0 %460
    %v462 = vsel %vm116, %v459, 0
    %v464 = vsel %vm116, %v461, 0
    %466 = vmatpush.xpose.msra.mxu0 0.0
    %467 = vmatpush.xpose.msra.mxu0 0.0
    %468 = vmatpush.xpose.msra.mxu0 0.0
    %469 = vmatpush.xpose.msra.mxu0 0.0
    %470 = vmatpush.xpose.msra.mxu0 0.0
    %471 = vmatpush.xpose.msra.mxu0 0.0
    %472 = vmatpush.xpose.msra.mxu0 0.0
    %473 = vmatpush.xpose.msra.mxu0 0.0
    %474 = vmatpush.xpose.msra.mxu0 0.0
    %475 = vmatpush.xpose.msra.mxu0 0.0
    %476 = vmatpush.xpose.msra.mxu0 0.0
    %477 = vmatpush.xpose.msra.mxu0 0.0
    %478 = vmatpush.xpose.msra.mxu0 0.0
    %479 = vmatpush.xpose.msra.mxu0 0.0
    %480 = vmatpush.xpose.msra.mxu0 0.0
    %481 = vmatpush.xpose.msra.mxu0 %v464
    %482 = vmatmul.f32.gmra.mxu0 %v462
    %v483 = vpop.f32.mrf.mxu0
    %v484 = vadd.f32 0.0, %v483
    %485 = vdwg.mxu0
    %486 = vrot.lane.b32.xlu0 %v105, 112
    %v487 = vpop.permute.xlu0 %486
    %488 = vrot.lane.b32.xlu0 %v105, 80
    %v489 = vpop.permute.xlu0 %488
    %v490 = vsel %vm116, %v487, 0
    %v492 = vsel %vm116, %v489, 0
    %494 = vmatpush.xpose.msra.mxu0 0.0
    %495 = vmatpush.xpose.msra.mxu0 0.0
    %496 = vmatpush.xpose.msra.mxu0 0.0
    %497 = vmatpush.xpose.msra.mxu0 0.0
    %498 = vmatpush.xpose.msra.mxu0 0.0
    %499 = vmatpush.xpose.msra.mxu0 0.0
    %500 = vmatpush.xpose.msra.mxu0 0.0
    %501 = vmatpush.xpose.msra.mxu0 0.0
    %502 = vmatpush.xpose.msra.mxu0 0.0
    %503 = vmatpush.xpose.msra.mxu0 0.0
    %504 = vmatpush.xpose.msra.mxu0 0.0
    %505 = vmatpush.xpose.msra.mxu0 0.0
    %506 = vmatpush.xpose.msra.mxu0 0.0
    %507 = vmatpush.xpose.msra.mxu0 0.0
    %508 = vmatpush.xpose.msra.mxu0 0.0
    %509 = vmatpush.xpose.msra.mxu0 %v492
    %510 = vmatmul.f32.gmra.mxu0 %v490
    %v511 = vpop.f32.mrf.mxu0
    %v512 = vadd.f32 0.0, %v511
    %513 = vdwg.mxu0
    %v514 = vmul.f32 %v484, 0.35355338
    %v515 = vmul.f32 %v512, 0.35355338
    %v516 = vadd.f32 %v514, %v172
    %v517 = vadd.f32 %v515, %v173
    %v518 = vsel %vm116, %v516, -inf
    %519 = vmax.xlane.f32.xlu0 %v518
    %v520 = vpop.xlane.xlu0 %519
    %v521 = vsel %vm116, %v517, -inf
    %522 = vmax.xlane.f32.xlu0 %v521
    %v523 = vpop.xlane.xlu0 %522
    %v524 = vsub.f32 %v516, %v520
    %v525 = vsub.f32 %v517, %v523
    %v526 = vmul.f32 %v524, 1.442695
    %v527 = vpow.pop %v526
    %v528 = vmul.f32 %v525, 1.442695
    %v529 = vpow.pop %v528
    %v530 = vsel %vm116, %v527, 0.0
    %531 = vadd.xlane.f32.xlu0 %v530
    %v532 = vpop.xlane.xlu0 %531
    %v533 = vsel %vm116, %v529, 0.0
    %534 = vadd.xlane.f32.xlu0 %v533
    %v535 = vpop.xlane.xlu0 %534
    %v536 = vrcp.pop %v532
    %v537 = vmul.f32 %v532, %v536
    %v538 = vsub.f32 1.0, %v537
    %v539 = vmul.f32 %v536, %v538
    %v540 = vadd.f32 %v536, %v539
    %vm541 = vweird.f32 %v532
    %vm542 = vweird.f32 %v536
    %vm543 = vmor %vm541, %vm542
    %v544 = vsel %vm543, %v536, %v540
    %v545 = vand.u32 2147483647, %v532
    %vm546 = vcmp.eq.f32.partialorder %v545, 8.507059e+37
    %v547 = vand.u32 %v532, 2147483648
    %v548 = vor.u32 1.1754944e-38, %v547
    %v549 = vsel %vm546, %v548, %v544
    %v550 = vmul.f32 %v527, %v549
    %v551 = vrcp.pop %v535
    %v552 = vmul.f32 %v535, %v551
    %v553 = vsub.f32 1.0, %v552
    %v554 = vmul.f32 %v551, %v553
    %v555 = vadd.f32 %v551, %v554
    %vm556 = vweird.f32 %v535
    %vm557 = vweird.f32 %v551
    %vm558 = vmor %vm556, %vm557
    %v559 = vsel %vm558, %v551, %v555
    %v560 = vand.u32 2147483647, %v535
    %vm561 = vcmp.eq.f32.partialorder %v560, 8.507059e+37
    %v562 = vand.u32 %v535, 2147483648
    %v563 = vor.u32 1.1754944e-38, %v562
    %v564 = vsel %vm561, %v563, %v559
    %v565 = vmul.f32 %v529, %v564
    %566 = vrot.lane.b32.xlu0 %v102, 62
    %v567 = vpop.permute.xlu0 %566
    %v570 = vsel %vm116, %v550, 0
    %572 = vmatpush.msra.mxu0 0.0
    %573 = vmatpush.msra.mxu0 0.0
    %574 = vmatpush.msra.mxu0 0.0
    %575 = vmatpush.msra.mxu0 0.0
    %576 = vmatpush.msra.mxu0 0.0
    %577 = vmatpush.msra.mxu0 0.0
    %578 = vmatpush.msra.mxu0 0.0
    %579 = vmatpush.msra.mxu0 0.0
    %580 = vmatpush.msra.mxu0 0.0
    %581 = vmatpush.msra.mxu0 0.0
    %582 = vmatpush.msra.mxu0 0.0
    %583 = vmatpush.msra.mxu0 0.0
    %584 = vmatpush.msra.mxu0 0.0
    %585 = vmatpush.msra.mxu0 0.0
    %586 = vmatpush.msra.mxu0 0.0
    %587 = vmatpush.msra.mxu0 %v567
    %588 = vmatmul.f32.gmra.mxu0 %v570
    %v589 = vpop.f32.mrf.mxu0
    %v590 = vadd.f32 0.0, %v589
    %591 = vdwg.mxu0
    %592 = vrot.lane.b32.xlu0 %v105, 62
    %v593 = vpop.permute.xlu0 %592
    %v596 = vsel %vm116, %v565, 0
    %598 = vmatpush.msra.mxu0 0.0
    %599 = vmatpush.msra.mxu0 0.0
    %600 = vmatpush.msra.mxu0 0.0
    %601 = vmatpush.msra.mxu0 0.0
    %602 = vmatpush.msra.mxu0 0.0
    %603 = vmatpush.msra.mxu0 0.0
    %604 = vmatpush.msra.mxu0 0.0
    %605 = vmatpush.msra.mxu0 0.0
    %606 = vmatpush.msra.mxu0 0.0
    %607 = vmatpush.msra.mxu0 0.0
    %608 = vmatpush.msra.mxu0 0.0
    %609 = vmatpush.msra.mxu0 0.0
    %610 = vmatpush.msra.mxu0 0.0
    %611 = vmatpush.msra.mxu0 0.0
    %612 = vmatpush.msra.mxu0 0.0
    %613 = vmatpush.msra.mxu0 %v593
    %614 = vmatmul.f32.gmra.mxu0 %v596
    %v615 = vpop.f32.mrf.mxu0
    %v616 = vadd.f32 0.0, %v615
    %617 = vdwg.mxu0
    %620 = vrot.lane.b32.xlu0 %v590, 68
    %v621 = vpop.permute.xlu0 %620
    %622 = vrot.lane.b32.xlu0 %v616, 68
    %v623 = vpop.permute.xlu0 %622
    %v626 = vadd.f32 %v456, %v621
    %v627 = vadd.f32 %v457, %v623
    %628 = vrot.lane.b32.xlu0 %v102, 104
    %v629 = vpop.permute.xlu0 %628
    %630 = vrot.lane.b32.xlu0 %v102, 72
    %v631 = vpop.permute.xlu0 %630
    %v632 = vsel %vm116, %v629, 0
    %v634 = vsel %vm116, %v631, 0
    %636 = vmatpush.xpose.msra.mxu0 0.0
    %637 = vmatpush.xpose.msra.mxu0 0.0
    %638 = vmatpush.xpose.msra.mxu0 0.0
    %639 = vmatpush.xpose.msra.mxu0 0.0
    %640 = vmatpush.xpose.msra.mxu0 0.0
    %641 = vmatpush.xpose.msra.mxu0 0.0
    %642 = vmatpush.xpose.msra.mxu0 0.0
    %643 = vmatpush.xpose.msra.mxu0 0.0
    %644 = vmatpush.xpose.msra.mxu0 0.0
    %645 = vmatpush.xpose.msra.mxu0 0.0
    %646 = vmatpush.xpose.msra.mxu0 0.0
    %647 = vmatpush.xpose.msra.mxu0 0.0
    %648 = vmatpush.xpose.msra.mxu0 0.0
    %649 = vmatpush.xpose.msra.mxu0 0.0
    %650 = vmatpush.xpose.msra.mxu0 0.0
    %651 = vmatpush.xpose.msra.mxu0 %v634
    %652 = vmatmul.f32.gmra.mxu0 %v632
    %v653 = vpop.f32.mrf.mxu0
    %v654 = vadd.f32 0.0, %v653
    %655 = vdwg.mxu0
    %656 = vrot.lane.b32.xlu0 %v105, 104
    %v657 = vpop.permute.xlu0 %656
    %658 = vrot.lane.b32.xlu0 %v105, 72
    %v659 = vpop.permute.xlu0 %658
    %v660 = vsel %vm116, %v657, 0
    %v662 = vsel %vm116, %v659, 0
    %664 = vmatpush.xpose.msra.mxu0 0.0
    %665 = vmatpush.xpose.msra.mxu0 0.0
    %666 = vmatpush.xpose.msra.mxu0 0.0
    %667 = vmatpush.xpose.msra.mxu0 0.0
    %668 = vmatpush.xpose.msra.mxu0 0.0
    %669 = vmatpush.xpose.msra.mxu0 0.0
    %670 = vmatpush.xpose.msra.mxu0 0.0
    %671 = vmatpush.xpose.msra.mxu0 0.0
    %672 = vmatpush.xpose.msra.mxu0 0.0
    %673 = vmatpush.xpose.msra.mxu0 0.0
    %674 = vmatpush.xpose.msra.mxu0 0.0
    %675 = vmatpush.xpose.msra.mxu0 0.0
    %676 = vmatpush.xpose.msra.mxu0 0.0
    %677 = vmatpush.xpose.msra.mxu0 0.0
    %678 = vmatpush.xpose.msra.mxu0 0.0
    %679 = vmatpush.xpose.msra.mxu0 %v662
    %680 = vmatmul.f32.gmra.mxu0 %v660
    %v681 = vpop.f32.mrf.mxu0
    %v682 = vadd.f32 0.0, %v681
    %683 = vdwg.mxu0
    %v684 = vmul.f32 %v654, 0.35355338
    %v685 = vmul.f32 %v682, 0.35355338
    %v686 = vadd.f32 %v684, %v172
    %v687 = vadd.f32 %v685, %v173
    %v688 = vsel %vm116, %v686, -inf
    %689 = vmax.xlane.f32.xlu0 %v688
    %v690 = vpop.xlane.xlu0 %689
    %v691 = vsel %vm116, %v687, -inf
    %692 = vmax.xlane.f32.xlu0 %v691
    %v693 = vpop.xlane.xlu0 %692
    %v694 = vsub.f32 %v686, %v690
    %v695 = vsub.f32 %v687, %v693
    %v696 = vmul.f32 %v694, 1.442695
    %v697 = vpow.pop %v696
    %v698 = vmul.f32 %v695, 1.442695
    %v699 = vpow.pop %v698
    %v700 = vsel %vm116, %v697, 0.0
    %701 = vadd.xlane.f32.xlu0 %v700
    %v702 = vpop.xlane.xlu0 %701
    %v703 = vsel %vm116, %v699, 0.0
    %704 = vadd.xlane.f32.xlu0 %v703
    %v705 = vpop.xlane.xlu0 %704
    %v706 = vrcp.pop %v702
    %v707 = vmul.f32 %v702, %v706
    %v708 = vsub.f32 1.0, %v707
    %v709 = vmul.f32 %v706, %v708
    %v710 = vadd.f32 %v706, %v709
    %vm711 = vweird.f32 %v702
    %vm712 = vweird.f32 %v706
    %vm713 = vmor %vm711, %vm712
    %v714 = vsel %vm713, %v706, %v710
    %v715 = vand.u32 2147483647, %v702
    %vm716 = vcmp.eq.f32.partialorder %v715, 8.507059e+37
    %v717 = vand.u32 %v702, 2147483648
    %v718 = vor.u32 1.1754944e-38, %v717
    %v719 = vsel %vm716, %v718, %v714
    %v720 = vmul.f32 %v697, %v719
    %v721 = vrcp.pop %v705
    %v722 = vmul.f32 %v705, %v721
    %v723 = vsub.f32 1.0, %v722
    %v724 = vmul.f32 %v721, %v723
    %v725 = vadd.f32 %v721, %v724
    %vm726 = vweird.f32 %v705
    %vm727 = vweird.f32 %v721
    %vm728 = vmor %vm726, %vm727
    %v729 = vsel %vm728, %v721, %v725
    %v730 = vand.u32 2147483647, %v705
    %vm731 = vcmp.eq.f32.partialorder %v730, 8.507059e+37
    %v732 = vand.u32 %v705, 2147483648
    %v733 = vor.u32 1.1754944e-38, %v732
    %v734 = vsel %vm731, %v733, %v729
    %v735 = vmul.f32 %v699, %v734
    %736 = vrot.lane.b32.xlu0 %v102, 61
    %v737 = vpop.permute.xlu0 %736
    %v740 = vsel %vm116, %v720, 0
    %742 = vmatpush.msra.mxu0 0.0
    %743 = vmatpush.msra.mxu0 0.0
    %744 = vmatpush.msra.mxu0 0.0
    %745 = vmatpush.msra.mxu0 0.0
    %746 = vmatpush.msra.mxu0 0.0
    %747 = vmatpush.msra.mxu0 0.0
    %748 = vmatpush.msra.mxu0 0.0
    %749 = vmatpush.msra.mxu0 0.0
    %750 = vmatpush.msra.mxu0 0.0
    %751 = vmatpush.msra.mxu0 0.0
    %752 = vmatpush.msra.mxu0 0.0
    %753 = vmatpush.msra.mxu0 0.0
    %754 = vmatpush.msra.mxu0 0.0
    %755 = vmatpush.msra.mxu0 0.0
    %756 = vmatpush.msra.mxu0 0.0
    %757 = vmatpush.msra.mxu0 %v737
    %758 = vmatmul.f32.gmra.mxu0 %v740
    %v759 = vpop.f32.mrf.mxu0
    %v760 = vadd.f32 0.0, %v759
    %761 = vdwg.mxu0
    %762 = vrot.lane.b32.xlu0 %v105, 61
    %v763 = vpop.permute.xlu0 %762
    %v766 = vsel %vm116, %v735, 0
    %768 = vmatpush.msra.mxu0 0.0
    %769 = vmatpush.msra.mxu0 0.0
    %770 = vmatpush.msra.mxu0 0.0
    %771 = vmatpush.msra.mxu0 0.0
    %772 = vmatpush.msra.mxu0 0.0
    %773 = vmatpush.msra.mxu0 0.0
    %774 = vmatpush.msra.mxu0 0.0
    %775 = vmatpush.msra.mxu0 0.0
    %776 = vmatpush.msra.mxu0 0.0
    %777 = vmatpush.msra.mxu0 0.0
    %778 = vmatpush.msra.mxu0 0.0
    %779 = vmatpush.msra.mxu0 0.0
    %780 = vmatpush.msra.mxu0 0.0
    %781 = vmatpush.msra.mxu0 0.0
    %782 = vmatpush.msra.mxu0 0.0
    %783 = vmatpush.msra.mxu0 %v763
    %784 = vmatmul.f32.gmra.mxu0 %v766
    %v785 = vpop.f32.mrf.mxu0
    %v786 = vadd.f32 0.0, %v785
    %787 = vdwg.mxu0
    %790 = vrot.lane.b32.xlu0 %v760, 68
    %v791 = vpop.permute.xlu0 %790
    %792 = vrot.lane.b32.xlu0 %v786, 68
    %v793 = vpop.permute.xlu0 %792
    %v796 = vadd.f32 %v626, %v791
    %v797 = vadd.f32 %v627, %v793
    %800 = vrot.lane.b32.xlu0 %v796, 60
    %v801 = vpop.permute.xlu0 %800
    %802 = vrot.lane.b32.xlu0 %v797, 60
    %v803 = vpop.permute.xlu0 %802
    %806 = vxpose.xlu0.b32.start [1/16] %v801, 128
    %807 = vxpose.xlu0.b32.cont [2/16] 0.0, 128
    %808 = vxpose.xlu0.b32.cont [3/16] 0.0, 128
    %809 = vxpose.xlu0.b32.cont [4/16] 0.0, 128
    %810 = vxpose.xlu0.b32.cont [5/16] 0.0, 128
    %811 = vxpose.xlu0.b32.cont [6/16] 0.0, 128
    %812 = vxpose.xlu0.b32.cont [7/16] 0.0, 128
    %813 = vxpose.xlu0.b32.cont [8/16] 0.0, 128
    %814 = vxpose.xlu0.b32.cont [9/16] 0.0, 128
    %815 = vxpose.xlu0.b32.cont [10/16] 0.0, 128
    %816 = vxpose.xlu0.b32.cont [11/16] 0.0, 128
    %817 = vxpose.xlu0.b32.cont [12/16] 0.0, 128
    %818 = vxpose.xlu0.b32.cont [13/16] 0.0, 128
    %819 = vxpose.xlu0.b32.cont [14/16] 0.0, 128
    %820 = vxpose.xlu0.b32.cont [15/16] 0.0, 128
    %821 = vxpose.xlu0.b32.end [16/16] 0.0, 128
    %v822 = vpop.trf.xlu0
    %v823 = vpop.trf.xlu0
    %v824 = vpop.trf.xlu0
    %v825 = vpop.trf.xlu0
    %v826 = vpop.trf.xlu0
    %v827 = vpop.trf.xlu0
    %v828 = vpop.trf.xlu0
    %v829 = vpop.trf.xlu0
    %v830 = vpop.trf.xlu0
    %v831 = vpop.trf.xlu0
    %v832 = vpop.trf.xlu0
    %v833 = vpop.trf.xlu0
    %v834 = vpop.trf.xlu0
    %v835 = vpop.trf.xlu0
    %v836 = vpop.trf.xlu0
    %v837 = vpop.trf.xlu0
    %838 = vxpose.xlu0.b32.start [1/16] %v803, 128
    %839 = vxpose.xlu0.b32.cont [2/16] 0.0, 128
    %840 = vxpose.xlu0.b32.cont [3/16] 0.0, 128
    %841 = vxpose.xlu0.b32.cont [4/16] 0.0, 128
    %842 = vxpose.xlu0.b32.cont [5/16] 0.0, 128
    %843 = vxpose.xlu0.b32.cont [6/16] 0.0, 128
    %844 = vxpose.xlu0.b32.cont [7/16] 0.0, 128
    %845 = vxpose.xlu0.b32.cont [8/16] 0.0, 128
    %846 = vxpose.xlu0.b32.cont [9/16] 0.0, 128
    %847 = vxpose.xlu0.b32.cont [10/16] 0.0, 128
    %848 = vxpose.xlu0.b32.cont [11/16] 0.0, 128
    %849 = vxpose.xlu0.b32.cont [12/16] 0.0, 128
    %850 = vxpose.xlu0.b32.cont [13/16] 0.0, 128
    %851 = vxpose.xlu0.b32.cont [14/16] 0.0, 128
    %852 = vxpose.xlu0.b32.cont [15/16] 0.0, 128
    %853 = vxpose.xlu0.b32.end [16/16] 0.0, 128
    %v854 = vpop.trf.xlu0
    %v855 = vpop.trf.xlu0
    %v856 = vpop.trf.xlu0
    %v857 = vpop.trf.xlu0
    %v858 = vpop.trf.xlu0
    %v859 = vpop.trf.xlu0
    %v860 = vpop.trf.xlu0
    %v861 = vpop.trf.xlu0
    %v862 = vpop.trf.xlu0
    %v863 = vpop.trf.xlu0
    %v864 = vpop.trf.xlu0
    %v865 = vpop.trf.xlu0
    %v866 = vpop.trf.xlu0
    %v867 = vpop.trf.xlu0
    %v868 = vpop.trf.xlu0
    %v869 = vpop.trf.xlu0
    %v870 = vsub.f32 %v107, 1.0
    %v871 = vsub.f32 %v108, 1.0
    %v872 = vmul.f32 %v870, 1e+08
    %v873 = vmul.f32 %v871, 1e+08
    %v874 = vadd.f32 %v822, %v872
    %v875 = vadd.f32 %v854, %v873
    %v878 = vrot.slane %v875, 7
    %vm879 = vcmask 1041409
    %v880 = vsel %vm879, %v878, %v874
    %vm882 = vcmask 58368
    %883 = vst.msk [vmem:[#allocation8] sm:$0x3] %vm882, %v880
    %v884 = vlaneseq
    %v885 = vand.u32 %v884, 127
    %v886 = vsel %vm882, %v880, -inf
    %887 = vmax.xlane.f32.xlu0 %v886
    %v888 = vpop.xlane.xlu0 %887
    %v890 = vrot.slane %v888, 1
    %vm893 = vcmp.ge.f32.partialorder %v874, %v888
    %vm894 = vcmp.ge.f32.partialorder %v875, %v890
    %v895 = vsel %vm893, %v885, 8
    %v896 = vsel %vm894, %v885, 8
    %v897 = vrot.slane %v896, 7
    %v898 = vsel %vm879, %v897, %v895
    %v899 = vsel %vm882, %v898, 2147483647
    %v900 = vand.u32 %v899, 65535
    %v901 = vshra.s32 %v899, 16
    %v902 = vcvt.s32.f32 %v900
    %v903 = vcvt.s32.f32 %v901
    %904 = vmin.xlane.f32.xlu0 %v903
    %v905 = vpop.xlane.xlu0 %904
    %vm906 = vcmp.eq.f32.partialorder %v903, %v905
    %v907 = vsel %vm906, %v902, inf
    %908 = vmin.xlane.f32.xlu0 %v907
    %v909 = vpop.xlane.xlu0 %908
    %v910 = vcvt.f32.s32 %v909
    %v911 = vcvt.f32.s32 %v905
    %v912 = vshll.u32 %v911, 16
    %v913 = vadd.s32 %v912, %v910
    %vm914 = vcmask 1024
    %915 = vst.msk [vmem:[%s5] sm:$0x3] %vm914, %v913
    // Predicated region
    $region30: #{tpu_custom_call.1} parent=1 // pred_check
      _
    $region31: #{tpu_custom_call.1} parent=1 // pred_check_branch
      %917 = sbr.rel (0) target = $region33
    $region32: #{tpu_custom_call.1} parent=1 // pred_region
      %919 = vsyncadd [#allocation4], 0
      %s921 = sshll.u32 [#allocation8], 4
      %s922 = int_to_ptr.vmem [resolvable:$true] %s921
      %s923 = sshll.u32 %s4, 4
      %s924 = int_to_ptr.hbm [resolvable:$true] %s923
      %926 = dma.vmem_to_hbm [thread:$0]  %s922, 32, %s924, [#allocation4]
    $region33: #{tpu_custom_call.1} parent=1 // pred_fallthru
      _
    // Predicated region
    $region34: #{tpu_custom_call.1} parent=1 // pred_check
      _
    $region35: #{tpu_custom_call.1} parent=1 // pred_check_branch
      %928 = sbr.rel (0) target = $region37
    $region36: #{tpu_custom_call.1} parent=1 // pred_region
      _
    $region37: #{tpu_custom_call.1} parent=1 // pred_fallthru
      _
    // Predicated region
    $region38: #{tpu_custom_call.1} parent=1 // pred_check
      _
    $region39: #{tpu_custom_call.1} parent=1 // pred_check_branch
      %930 = sbr.rel (0) target = $region41
    $region40: #{tpu_custom_call.1} parent=1 // pred_region
      %932 = dma.done [#allocation4], 32
    $region41: #{tpu_custom_call.1} parent=1 // pred_fallthru
      _
    // Predicated region
    $region42: #{tpu_custom_call.1} parent=1 // pred_check
      _
    $region43: #{tpu_custom_call.1} parent=1 // pred_check_branch
      %934 = sbr.rel (0) target = $region45
    $region44: #{tpu_custom_call.1} parent=1 // pred_region
      _
    $region45: #{tpu_custom_call.1} parent=1 // pred_fallthru
      _
    %935 = vsyncpa [#allocation3], 1
    %936 = vsyncpa [#allocation6], 1
    %937 = vsyncpa [#allocation4], 1

</llo_original>
